<compile_context>
chip_gen: v6e
topology: v6e:2x2x1
jax: 0.10.0
libtpu: 0.0.40
codegen_flags: <defaults>
</compile_context>

<pallas_src>
import functools
import math

import numpy as np
import jax
import jax.numpy as jnp
from jax import lax
from jax.experimental import pallas as pl
from jax.experimental.pallas import tpu as pltpu

_LANES = 128
_SUBLANES = 8


# ----------------------------- in-kernel math helpers -----------------------------

def _atan_abs(a):
    """Cephes-style atan for a >= 0 (float32, ~1e-7 error). VPU ops only."""
    big = a > 2.414213562373095          # tan(3*pi/8)
    mid = a > 0.4142135623730951         # tan(pi/8)
    x = jnp.where(big, -1.0 / a, jnp.where(mid, (a - 1.0) / (a + 1.0), a))
    y0 = jnp.where(big, 0.5 * math.pi, jnp.where(mid, 0.25 * math.pi, 0.0))
    z = x * x
    poly = ((((8.05374449538e-2 * z - 1.38776856032e-1) * z
              + 1.99777106478e-1) * z - 3.33329491539e-1) * z) * x + x
    return y0 + poly


def _angle(im, re):
    """atan2(im, re) with torch.angle / np.arctan2 conventions; safe at (0, 0)."""
    t = _atan_abs(jnp.abs(im / re))      # NaN only at (0,0); discarded by the selects below
    pi = math.pi
    return jnp.where(
        re > 0.0, jnp.where(im >= 0.0, t, -t),
        jnp.where(
            re < 0.0, jnp.where(im >= 0.0, pi - t, t - pi),
            # re == 0
            jnp.where(im > 0.0, 0.5 * pi, jnp.where(im < 0.0, -0.5 * pi, 0.0))))


# ----------------------------------- the kernel ------------------------------------

def _spectral_dropout_kernel(xr_ref, xi_ref, km_ref, kp_ref, or_ref, oi_ref, *, scale):
    xr = xr_ref[...]
    xi = xi_ref[...]

    mag = jnp.sqrt(xr * xr + xi * xi)
    theta = _angle(xi, xr)

    # F.dropout (train-mode) applied independently to magnitude and phase:
    # zero with prob p, survivors scaled by 1/(1-p). `scale` is a compile-time constant.
    mag_d = mag * (km_ref[...] * scale)
    theta_d = theta * (kp_ref[...] * scale)

    or_ref[...] = mag_d * jnp.cos(theta_d)
    oi_ref[...] = mag_d * jnp.sin(theta_d)


def _spectral_dropout_slab(xr, xi, keep_m, keep_p, scale):
    rows, lanes = xr.shape
    kernel = functools.partial(_spectral_dropout_kernel, scale=scale)
    spec = pl.BlockSpec((rows, lanes), lambda i: (0, 0))
    return pl.pallas_call(
        kernel,
        out_shape=(jax.ShapeDtypeStruct((rows, lanes), jnp.float32),
                   jax.ShapeDtypeStruct((rows, lanes), jnp.float32)),
        grid=(1,),                                   # whole (tiny) problem in one step
        in_specs=[spec, spec, spec, spec],
        out_specs=(spec, spec),
        compiler_params=pltpu.CompilerParams(dimension_semantics=("arbitrary",)),
    )(xr, xi, keep_m, keep_p)


# ----------------------------------- wrapper API ------------------------------------

def _draw_keep_masks(key, p, shape):
    k_mag, k_phase = jax.random.split(key)
    keep_mag = jax.random.bernoulli(k_mag, 1.0 - p, shape).astype(jnp.float32)
    keep_phase = jax.random.bernoulli(k_phase, 1.0 - p, shape).astype(jnp.float32)
    return keep_mag, keep_phase


def spectral_dropout(x, p, keep_mag, keep_phase):
    """SpectralDropout forward for complex64 `x` (any shape), with explicit 0/1 keep-masks."""
    if not (0.0 <= p < 1.0):
        raise ValueError("p must be in [0, 1)")
    shape = x.shape
    n = int(np.prod(shape))
    scale = 1.0 / (1.0 - p)

    tile = _SUBLANES * _LANES
    n_pad = ((n + tile - 1) // tile) * tile
    rows = n_pad // _LANES

    def pack(a):                                     # flatten + pad to a lane-dense (rows,128) slab
        a = a.astype(jnp.float32).reshape(-1)
        return jnp.pad(a, (0, n_pad - n)).reshape(rows, _LANES)

    out_r, out_i = _spectral_dropout_slab(
        pack(jnp.real(x)), pack(jnp.imag(x)), pack(keep_mag), pack(keep_phase), scale)

    out_r = out_r.reshape(-1)[:n].reshape(shape)
    out_i = out_i.reshape(-1)[:n].reshape(shape)
    return lax.complex(out_r, out_i)


class SpectralDropout:
    """Mirror of the torch module: draws fresh masks from `key` on every call."""

    def __init__(self, p=0.5):
        self.p = p

    def __call__(self, x, key):
        keep_mag, keep_phase = _draw_keep_masks(key, self.p, x.shape)
        return spectral_dropout(x, self.p, keep_mag, keep_phase)


# ----------------------------------- reference --------------------------------------

def reference_np(x, keep_mag, keep_phase, p):
    scale = 1.0 / (1.0 - p)
    xc = np.asarray(x).astype(np.complex128)
    mag = np.abs(xc) * np.asarray(keep_mag, np.float64) * scale
    ph = np.angle(xc) * np.asarray(keep_phase, np.float64) * scale
    return mag * np.cos(ph) + 1j * mag * np.sin(ph)


if __name__ == "__main__":
    B, S, D = 2, 8, 32          # complex activations of the spectral ViT block
    P = 0.5                     # module default

    key = jax.random.PRNGKey(0)
    k_re, k_im, k_drop = jax.random.split(key, 3)
    x = lax.complex(jax.random.normal(k_re, (B, S, D), jnp.float32),
                    jax.random.normal(k_im, (B, S, D), jnp.float32))

    keep_mag, keep_phase = _draw_keep_masks(k_drop, P, x.shape)
    out = spectral_dropout(x, P, keep_mag, keep_phase)
    out = jax.block_until_ready(out)

    ref = reference_np(x, keep_mag, keep_phase, P)
    err = np.abs(np.asarray(out) - ref).max()
    assert np.allclose(np.asarray(out), ref, atol=1e-4, rtol=1e-3), f"max abs err {err}"

    # p = 0 (all-keep masks) must be an identity up to fp: mag*cos(angle)=re, mag*sin(angle)=im.
    ones = jnp.ones(x.shape, jnp.float32)
    out0 = jax.block_until_ready(spectral_dropout(x, 0.0, ones, ones))
    err0 = np.abs(np.asarray(out0) - np.asarray(x)).max()
    assert err0 < 1e-4, f"p=0 identity err {err0}"

    print("KERNEL_OK")
</pallas_src>

<mosaic_0001>
module attributes {stable_mosaic.version = 11 : i64} {
  func.func @_spectral_dropout_kernel(%arg0: i32, %arg1: memref<8x128xf32, #tpu.memory_space<vmem>>, %arg2: memref<8x128xf32, #tpu.memory_space<vmem>>, %arg3: memref<8x128xf32, #tpu.memory_space<vmem>>, %arg4: memref<8x128xf32, #tpu.memory_space<vmem>>, %arg5: memref<8x128xf32, #tpu.memory_space<vmem>>, %arg6: memref<8x128xf32, #tpu.memory_space<vmem>>) attributes {dimension_semantics = [#tpu.dimension_semantics<arbitrary>], iteration_bounds = array<i64: 1>, scalar_prefetch = 0 : i64, scratch_operands = 0 : i64, tpu.core_type = #tpu.core_type<tc>, window_params = [{pipeline_mode = #tpu.pipeline_mode<synchronous>, transform_indices = @transform_0, window_bounds = array<i64: 8, 128>}, {pipeline_mode = #tpu.pipeline_mode<synchronous>, transform_indices = @transform_1, window_bounds = array<i64: 8, 128>}, {pipeline_mode = #tpu.pipeline_mode<synchronous>, transform_indices = @transform_2, window_bounds = array<i64: 8, 128>}, {pipeline_mode = #tpu.pipeline_mode<synchronous>, transform_indices = @transform_3, window_bounds = array<i64: 8, 128>}, {pipeline_mode = #tpu.pipeline_mode<synchronous>, transform_indices = @transform_4, window_bounds = array<i64: 8, 128>}, {pipeline_mode = #tpu.pipeline_mode<synchronous>, transform_indices = @transform_5, window_bounds = array<i64: 8, 128>}]} {
    %c0 = arith.constant 0 : index
    %c0_0 = arith.constant 0 : index
    %0 = vector.load %arg1[%c0, %c0_0] : memref<8x128xf32, #tpu.memory_space<vmem>>, vector<8x128xf32>
    %c0_1 = arith.constant 0 : index
    %c0_2 = arith.constant 0 : index
    %1 = vector.load %arg2[%c0_1, %c0_2] : memref<8x128xf32, #tpu.memory_space<vmem>>, vector<8x128xf32>
    %2 = arith.mulf %0, %0 : vector<8x128xf32>
    %3 = arith.mulf %1, %1 : vector<8x128xf32>
    %4 = arith.addf %2, %3 : vector<8x128xf32>
    %5 = math.sqrt %4 : vector<8x128xf32>
    %6 = arith.divf %1, %0 : vector<8x128xf32>
    %7 = math.absf %6 : vector<8x128xf32>
    %cst = arith.constant 2.41421366 : f32
    %8 = vector.broadcast %cst : f32 to vector<8x128xf32>
    %9 = arith.cmpf ogt, %7, %8 : vector<8x128xf32>
    %cst_3 = arith.constant 0.414213568 : f32
    %10 = vector.broadcast %cst_3 : f32 to vector<8x128xf32>
    %11 = arith.cmpf ogt, %7, %10 : vector<8x128xf32>
    %cst_4 = arith.constant -1.000000e+00 : f32
    %12 = vector.broadcast %cst_4 : f32 to vector<8x128xf32>
    %13 = arith.divf %12, %7 : vector<8x128xf32>
    %cst_5 = arith.constant 1.000000e+00 : f32
    %14 = vector.broadcast %cst_5 : f32 to vector<8x128xf32>
    %15 = arith.subf %7, %14 : vector<8x128xf32>
    %cst_6 = arith.constant 1.000000e+00 : f32
    %16 = vector.broadcast %cst_6 : f32 to vector<8x128xf32>
    %17 = arith.addf %7, %16 : vector<8x128xf32>
    %18 = arith.divf %15, %17 : vector<8x128xf32>
    %19 = arith.select %11, %18, %7 : vector<8x128xi1>, vector<8x128xf32>
    %20 = arith.select %9, %13, %19 : vector<8x128xi1>, vector<8x128xf32>
    %cst_7 = arith.constant 0.785398185 : f32
    %cst_8 = arith.constant 0.000000e+00 : f32
    %21 = vector.broadcast %cst_7 : f32 to vector<8x128xf32>
    %22 = vector.broadcast %cst_8 : f32 to vector<8x128xf32>
    %23 = arith.select %11, %21, %22 : vector<8x128xi1>, vector<8x128xf32>
    %cst_9 = arith.constant 1.57079637 : f32
    %24 = vector.broadcast %cst_9 : f32 to vector<8x128xf32>
    %25 = arith.select %9, %24, %23 : vector<8x128xi1>, vector<8x128xf32>
    %26 = arith.mulf %20, %20 : vector<8x128xf32>
    %cst_10 = arith.constant 0.0805374458 : f32
    %27 = vector.broadcast %cst_10 : f32 to vector<8x128xf32>
    %28 = arith.mulf %27, %26 : vector<8x128xf32>
    %cst_11 = arith.constant 0.138776854 : f32
    %29 = vector.broadcast %cst_11 : f32 to vector<8x128xf32>
    %30 = arith.subf %28, %29 : vector<8x128xf32>
    %31 = arith.mulf %30, %26 : vector<8x128xf32>
    %cst_12 = arith.constant 0.199777111 : f32
    %32 = vector.broadcast %cst_12 : f32 to vector<8x128xf32>
    %33 = arith.addf %31, %32 : vector<8x128xf32>
    %34 = arith.mulf %33, %26 : vector<8x128xf32>
    %cst_13 = arith.constant 0.333329499 : f32
    %35 = vector.broadcast %cst_13 : f32 to vector<8x128xf32>
    %36 = arith.subf %34, %35 : vector<8x128xf32>
    %37 = arith.mulf %36, %26 : vector<8x128xf32>
    %38 = arith.mulf %37, %20 : vector<8x128xf32>
    %39 = arith.addf %38, %20 : vector<8x128xf32>
    %40 = arith.addf %25, %39 : vector<8x128xf32>
    %cst_14 = arith.constant 0.000000e+00 : f32
    %41 = vector.broadcast %cst_14 : f32 to vector<8x128xf32>
    %42 = arith.cmpf ogt, %0, %41 : vector<8x128xf32>
    %cst_15 = arith.constant 0.000000e+00 : f32
    %43 = vector.broadcast %cst_15 : f32 to vector<8x128xf32>
    %44 = arith.cmpf oge, %1, %43 : vector<8x128xf32>
    %cst_16 = arith.constant 0.000000e+00 : f32
    %45 = vector.broadcast %cst_16 : f32 to vector<8x128xf32>
    %46 = arith.subf %45, %40 : vector<8x128xf32>
    %47 = arith.select %44, %40, %46 : vector<8x128xi1>, vector<8x128xf32>
    %cst_17 = arith.constant 0.000000e+00 : f32
    %48 = vector.broadcast %cst_17 : f32 to vector<8x128xf32>
    %49 = arith.cmpf olt, %0, %48 : vector<8x128xf32>
    %cst_18 = arith.constant 0.000000e+00 : f32
    %50 = vector.broadcast %cst_18 : f32 to vector<8x128xf32>
    %51 = arith.cmpf oge, %1, %50 : vector<8x128xf32>
    %cst_19 = arith.constant 3.14159274 : f32
    %52 = vector.broadcast %cst_19 : f32 to vector<8x128xf32>
    %53 = arith.subf %52, %40 : vector<8x128xf32>
    %cst_20 = arith.constant 3.14159274 : f32
    %54 = vector.broadcast %cst_20 : f32 to vector<8x128xf32>
    %55 = arith.subf %40, %54 : vector<8x128xf32>
    %56 = arith.select %51, %53, %55 : vector<8x128xi1>, vector<8x128xf32>
    %cst_21 = arith.constant 0.000000e+00 : f32
    %57 = vector.broadcast %cst_21 : f32 to vector<8x128xf32>
    %58 = arith.cmpf ogt, %1, %57 : vector<8x128xf32>
    %cst_22 = arith.constant 0.000000e+00 : f32
    %59 = vector.broadcast %cst_22 : f32 to vector<8x128xf32>
    %60 = arith.cmpf olt, %1, %59 : vector<8x128xf32>
    %cst_23 = arith.constant -1.57079637 : f32
    %cst_24 = arith.constant 0.000000e+00 : f32
    %61 = vector.broadcast %cst_23 : f32 to vector<8x128xf32>
    %62 = vector.broadcast %cst_24 : f32 to vector<8x128xf32>
    %63 = arith.select %60, %61, %62 : vector<8x128xi1>, vector<8x128xf32>
    %cst_25 = arith.constant 1.57079637 : f32
    %64 = vector.broadcast %cst_25 : f32 to vector<8x128xf32>
    %65 = arith.select %58, %64, %63 : vector<8x128xi1>, vector<8x128xf32>
    %66 = arith.select %49, %56, %65 : vector<8x128xi1>, vector<8x128xf32>
    %67 = arith.select %42, %47, %66 : vector<8x128xi1>, vector<8x128xf32>
    %c0_26 = arith.constant 0 : index
    %c0_27 = arith.constant 0 : index
    %68 = vector.load %arg3[%c0_26, %c0_27] : memref<8x128xf32, #tpu.memory_space<vmem>>, vector<8x128xf32>
    %cst_28 = arith.constant 2.000000e+00 : f32
    %69 = vector.broadcast %cst_28 : f32 to vector<8x128xf32>
    %70 = arith.mulf %68, %69 : vector<8x128xf32>
    %71 = arith.mulf %5, %70 : vector<8x128xf32>
    %c0_29 = arith.constant 0 : index
    %c0_30 = arith.constant 0 : index
    %72 = vector.load %arg4[%c0_29, %c0_30] : memref<8x128xf32, #tpu.memory_space<vmem>>, vector<8x128xf32>
    %cst_31 = arith.constant 2.000000e+00 : f32
    %73 = vector.broadcast %cst_31 : f32 to vector<8x128xf32>
    %74 = arith.mulf %72, %73 : vector<8x128xf32>
    %75 = arith.mulf %67, %74 : vector<8x128xf32>
    %76 = math.cos %75 : vector<8x128xf32>
    %77 = arith.mulf %71, %76 : vector<8x128xf32>
    %c0_32 = arith.constant 0 : index
    %c0_33 = arith.constant 0 : index
    %78 = vector.load %arg5[%c0_32, %c0_33] : memref<8x128xf32, #tpu.memory_space<vmem>>, vector<8x128xf32>
    tpu.vector_store %arg5[%c0_32, %c0_33], %77 {strides = array<i32>} : memref<8x128xf32, #tpu.memory_space<vmem>>, vector<8x128xf32>,
    %79 = math.sin %75 : vector<8x128xf32>
    %80 = arith.mulf %71, %79 : vector<8x128xf32>
    %c0_34 = arith.constant 0 : index
    %c0_35 = arith.constant 0 : index
    %81 = vector.load %arg6[%c0_34, %c0_35] : memref<8x128xf32, #tpu.memory_space<vmem>>, vector<8x128xf32>
    tpu.vector_store %arg6[%c0_34, %c0_35], %80 {strides = array<i32>} : memref<8x128xf32, #tpu.memory_space<vmem>>, vector<8x128xf32>,
    return
  }
  func.func @transform_0(%arg0: i32) -> (i32, i32) {
    %c0_i32 = arith.constant 0 : i32
    %c0_i32_0 = arith.constant 0 : i32
    %c0_i32_1 = arith.constant 0 : i32
    return %c0_i32, %c0_i32_0 : i32, i32
  }
  func.func @transform_1(%arg0: i32) -> (i32, i32) {
    %c0_i32 = arith.constant 0 : i32
    %c0_i32_0 = arith.constant 0 : i32
    %c0_i32_1 = arith.constant 0 : i32
    return %c0_i32, %c0_i32_0 : i32, i32
  }
  func.func @transform_2(%arg0: i32) -> (i32, i32) {
    %c0_i32 = arith.constant 0 : i32
    %c0_i32_0 = arith.constant 0 : i32
    %c0_i32_1 = arith.constant 0 : i32
    return %c0_i32, %c0_i32_0 : i32, i32
  }
  func.func @transform_3(%arg0: i32) -> (i32, i32) {
    %c0_i32 = arith.constant 0 : i32
    %c0_i32_0 = arith.constant 0 : i32
    %c0_i32_1 = arith.constant 0 : i32
    return %c0_i32, %c0_i32_0 : i32, i32
  }
  func.func @transform_4(%arg0: i32) -> (i32, i32) {
    %c0_i32 = arith.constant 0 : i32
    %c0_i32_0 = arith.constant 0 : i32
    %c0_i32_1 = arith.constant 0 : i32
    return %c0_i32, %c0_i32_0 : i32, i32
  }
  func.func @transform_5(%arg0: i32) -> (i32, i32) {
    %c0_i32 = arith.constant 0 : i32
    %c0_i32_0 = arith.constant 0 : i32
    %c0_i32_1 = arith.constant 0 : i32
    return %c0_i32, %c0_i32_0 : i32, i32
  }
}

</mosaic_0001>

<llo_original>
// kernel: tpu_custom_call.1
$region0: #{tpu_custom_call.1}
  #allocation0 [shape = 'u32[]', space=smem, size = 0x4, offset = 0x4, fixed_abs, tag = 'smem constant byte address 0x4 - core index']
  #allocation1 [shape = 'u32[144,128]{1,0:T(1,128)}', space=vmem, size = 0x12000, scoped, tag = 'internal scratch']
  %s0 = inlined_call_operand.hbm [shape: f32[8,128], index: 0, kind: input, shape index: {}]
  %s1 = inlined_call_operand.hbm [shape: f32[8,128], index: 1, kind: input, shape index: {}]
  %s2 = inlined_call_operand.hbm [shape: f32[8,128], index: 2, kind: input, shape index: {}]
  %s3 = inlined_call_operand.hbm [shape: f32[8,128], index: 3, kind: input, shape index: {}]
  %s4 = inlined_call_operand.hbm [shape: f32[8,128], index: 4, kind: output, shape index: {0}]
  %s5 = inlined_call_operand.hbm [shape: f32[8,128], index: 5, kind: output, shape index: {1}]
  %6 = xla_tuple %s4, %s5
  %s7 = sld [smem:[#allocation0]]
  $region50: #{tpu_custom_call.1} parent=0
    _
  %s9 = ssub.s32 1, %s7
  %s10 = scalar_select 0, %s9, %s7
  $region1: #{tpu_custom_call.1} parent=0
    #allocation2 [shape = 'u8[4096]{0}', space=vmem, size = 0x1000, scoped, tag = 'input window, operand 0, single buffered']
    #allocation3 [shape = 's32[1]{0}', space=sflag, size = 0x4, scoped, tag = 'scoped memory for tpu_custom_call.1']
    #allocation4 [shape = 's32[1]{0}', space=sflag, size = 0x4, scoped, tag = 'scoped memory for tpu_custom_call.1']
    #allocation5 [shape = 'u8[4096]{0}', space=vmem, size = 0x1000, scoped, tag = 'input window, operand 1, single buffered']
    #allocation6 [shape = 's32[1]{0}', space=sflag, size = 0x4, scoped, tag = 'scoped memory for tpu_custom_call.1']
    #allocation7 [shape = 'u8[4096]{0}', space=vmem, size = 0x1000, scoped, tag = 'input window, operand 2, single buffered']
    #allocation8 [shape = 'u8[4096]{0}', space=vmem, size = 0x1000, scoped, tag = 'input window, operand 3, single buffered']
    #allocation9 [shape = 's32[1]{0}', space=sflag, size = 0x4, scoped, tag = 'scoped memory for tpu_custom_call.1']
    #allocation10 [shape = 'u8[4096]{0}', space=vmem, size = 0x1000, scoped, tag = 'output window, operand 0, single buffered']
    #allocation11 [shape = 'u8[4096]{0}', space=vmem, size = 0x1000, scoped, tag = 'output window, operand 1, single buffered']
    #allocation12 [shape = 's32[1]{0}', space=sflag, size = 0x4, scoped, tag = 'scoped memory for tpu_custom_call.1']
    %11 = vsyncpa [#allocation3], 0
    %12 = vsyncpa [#allocation6], 0
    %13 = vsyncpa [#allocation9], 0
    %14 = vsyncpa [#allocation4], 0
    %15 = vsyncpa [#allocation12], 0
    // Predicated region
    $region2: #{tpu_custom_call.1} parent=1 // pred_check
      _
    $region3: #{tpu_custom_call.1} parent=1 // pred_check_branch
      %17 = sbr.rel (0) target = $region5
    $region4: #{tpu_custom_call.1} parent=1 // pred_region
      %s19 = ssub.s32 128, 128
      %20 = vsyncadd [#allocation3], %s19
      %s22 = sshll.u32 [#allocation2], 4
      %s23 = int_to_ptr.vmem [resolvable:$true] %s22
      %25 = dma.hbm_to_vmem [thread:$0]  %s0, 128, %s23, [#allocation3]
    $region5: #{tpu_custom_call.1} parent=1 // pred_fallthru
      _
    // Predicated region
    $region6: #{tpu_custom_call.1} parent=1 // pred_check
      _
    $region7: #{tpu_custom_call.1} parent=1 // pred_check_branch
      %27 = sbr.rel (0) target = $region9
    $region8: #{tpu_custom_call.1} parent=1 // pred_region
      %s29 = ssub.s32 128, 128
      %30 = vsyncadd [#allocation6], %s29
      %s32 = sshll.u32 [#allocation5], 4
      %s33 = int_to_ptr.vmem [resolvable:$true] %s32
      %35 = dma.hbm_to_vmem [thread:$0]  %s1, 128, %s33, [#allocation6]
    $region9: #{tpu_custom_call.1} parent=1 // pred_fallthru
      _
    // Predicated region
    $region10: #{tpu_custom_call.1} parent=1 // pred_check
      _
    $region11: #{tpu_custom_call.1} parent=1 // pred_check_branch
      %37 = sbr.rel (0) target = $region13
    $region12: #{tpu_custom_call.1} parent=1 // pred_region
      %s39 = ssub.s32 128, 128
      %40 = vsyncadd [#allocation6], %s39
      %s42 = sshll.u32 [#allocation7], 4
      %s43 = int_to_ptr.vmem [resolvable:$true] %s42
      %45 = dma.hbm_to_vmem [thread:$0]  %s2, 128, %s43, [#allocation6]
    $region13: #{tpu_custom_call.1} parent=1 // pred_fallthru
      _
    // Predicated region
    $region14: #{tpu_custom_call.1} parent=1 // pred_check
      _
    $region15: #{tpu_custom_call.1} parent=1 // pred_check_branch
      %47 = sbr.rel (0) target = $region17
    $region16: #{tpu_custom_call.1} parent=1 // pred_region
      %s49 = ssub.s32 128, 128
      %50 = vsyncadd [#allocation9], %s49
      %s52 = sshll.u32 [#allocation8], 4
      %s53 = int_to_ptr.vmem [resolvable:$true] %s52
      %55 = dma.hbm_to_vmem [thread:$0]  %s3, 128, %s53, [#allocation9]
    $region17: #{tpu_custom_call.1} parent=1 // pred_fallthru
      _
    // Predicated region
    $region18: #{tpu_custom_call.1} parent=1 // pred_check
      _
    $region19: #{tpu_custom_call.1} parent=1 // pred_check_branch
      %57 = sbr.rel (0) target = $region21
    $region20: #{tpu_custom_call.1} parent=1 // pred_region
      %58 = dma.done [#allocation3], 128
    $region21: #{tpu_custom_call.1} parent=1 // pred_fallthru
      _
    // Predicated region
    $region22: #{tpu_custom_call.1} parent=1 // pred_check
      _
    $region23: #{tpu_custom_call.1} parent=1 // pred_check_branch
      %60 = sbr.rel (0) target = $region25
    $region24: #{tpu_custom_call.1} parent=1 // pred_region
      %61 = dma.done [#allocation6], 128
    $region25: #{tpu_custom_call.1} parent=1 // pred_fallthru
      _
    // Predicated region
    $region26: #{tpu_custom_call.1} parent=1 // pred_check
      _
    $region27: #{tpu_custom_call.1} parent=1 // pred_check_branch
      %63 = sbr.rel (0) target = $region29
    $region28: #{tpu_custom_call.1} parent=1 // pred_region
      %64 = dma.done [#allocation6], 128
    $region29: #{tpu_custom_call.1} parent=1 // pred_fallthru
      _
    // Predicated region
    $region30: #{tpu_custom_call.1} parent=1 // pred_check
      _
    $region31: #{tpu_custom_call.1} parent=1 // pred_check_branch
      %66 = sbr.rel (0) target = $region33
    $region32: #{tpu_custom_call.1} parent=1 // pred_region
      %67 = dma.done [#allocation9], 128
    $region33: #{tpu_custom_call.1} parent=1 // pred_fallthru
      _
    %v68 = vld [vmem:[#allocation2] sm:$0xff]
    %v69 = vld [vmem:[#allocation5] sm:$0xff]
    %v70 = vmul.f32 %v68, %v68
    %v71 = vmul.f32 %v69, %v69
    %v72 = vadd.f32 %v70, %v71
    %v73 = vrsqrt.pop %v72
    %v74 = vmul.f32 %v72, %v73
    %vm75 = vcmp.eq.f32.partialorder %v72, inf
    %v76 = vsel %vm75, %v72, %v74
    %vm77 = vcmp.eq.f32.partialorder %v72, 0.0
    %v78 = vand.u32 %v72, 2147483648
    %v79 = vsel %vm77, %v78, %v76
    %v80 = vrcp.pop %v68
    %v81 = vmul.f32 %v69, %v80
    %v82 = vand.u32 2147483647, %v81
    %vm83 = vcmp.gt.f32.partialorder %v82, 2.4142137
    %vm84 = vcmp.gt.f32.partialorder %v82, 0.41421357
    %v85 = vrcp.pop %v82
    %v86 = vmul.f32 -1.0, %v85
    %v87 = vsub.f32 %v82, 1.0
    %v88 = vadd.f32 %v82, 1.0
    %v89 = vrcp.pop %v88
    %v90 = vmul.f32 %v87, %v89
    %v91 = vsel %vm84, %v90, %v82
    %v92 = vsel %vm83, %v86, %v91
    %v93 = vsel %vm84, 0.7853982, 0.0
    %v94 = vsel %vm83, 1.5707964, %v93
    %v95 = vmul.f32 %v92, %v92
    %v96 = vmul.f32 %v95, 0.080537446
    %v97 = vsub.f32 %v96, 0.13877685
    %v98 = vmul.f32 %v97, %v95
    %v99 = vadd.f32 %v98, 0.19977711
    %v100 = vmul.f32 %v99, %v95
    %v101 = vsub.f32 %v100, 0.3333295
    %v102 = vmul.f32 %v101, %v95
    %v103 = vmul.f32 %v102, %v92
    %v104 = vadd.f32 %v103, %v92
    %v105 = vadd.f32 %v94, %v104
    %vm106 = vcmp.gt.f32.partialorder %v68, 0.0
    %vm107 = vcmp.ge.f32.partialorder %v69, 0.0
    %v108 = vsub.f32 0.0, %v105
    %v109 = vsel %vm107, %v105, %v108
    %vm110 = vcmp.lt.f32.partialorder %v68, 0.0
    %v111 = vsub.f32 3.1415927, %v105
    %v112 = vsub.f32 %v105, 3.1415927
    %v113 = vsel %vm107, %v111, %v112
    %vm114 = vcmp.gt.f32.partialorder %v69, 0.0
    %vm115 = vcmp.lt.f32.partialorder %v69, 0.0
    %v116 = vsel %vm115, -1.5707964, 0.0
    %v117 = vsel %vm114, 1.5707964, %v116
    %v118 = vsel %vm110, %v113, %v117
    %v119 = vsel %vm106, %v109, %v118
    %v120 = vld [vmem:[#allocation7] sm:$0xff]
    %v121 = vmul.f32 %v120, 2.0
    %v122 = vmul.f32 %v79, %v121
    %v123 = vld [vmem:[#allocation8] sm:$0xff]
    %v124 = vmul.f32 %v123, 2.0
    %v125 = vmul.f32 %v119, %v124
    %v126 = vand.u32 2147483647, %v125
    %vm127 = vcmp.le.f32.partialorder %v126, 0.7853982
    %vm128 = vcmp.lt.s32.totalorder %v125, 0
    %v129 = vand.u32 %v125, 2139095040
    %v130 = vshrl.u32 %v129, 23
    %v131 = vsub.s32 %v130, 127
    %v132 = vand.u32 2147483647, %v125
    %v133 = vand.u32 %v132, 8388607
    %v134 = vor.u32 %v133, 8388608
    %v135 = vsub.s32 0, %v134
    %v136 = vadd.s32 %v131, 1
    %vm137 = vcmp.gt.s32.totalorder %v136, 0
    %v138 = vsel %vm137, %v136, 0
    %v139 = vshrl.u32 %v138, 5
    %v140 = vand.u32 %v138, 31
    %v141 = vsub.s32 32, %v140
    %v142 = vshrl.u32 683565275, %v141
    %v143 = vshll.u32 683565275, %v140
    %v144 = vshrl.u32 2475754826, %v141
    %v145 = vor.u32 %v143, %v144
    %v146 = vshll.u32 2475754826, %v140
    %v147 = vshrl.u32 2131351028, %v141
    %v148 = vor.u32 %v146, %v147
    %v149 = vshll.u32 2131351028, %v140
    %v150 = vshrl.u32 2102212464, %v141
    %v151 = vor.u32 %v149, %v150
    %v152 = vshll.u32 2102212464, %v140
    %v153 = vshrl.u32 920167782, %v141
    %v154 = vor.u32 %v152, %v153
    %v155 = vshll.u32 920167782, %v140
    %v156 = vshrl.u32 1326507024, %v141
    %v157 = vor.u32 %v155, %v156
    %vm158 = vcmp.lt.s32.totalorder %v139, 1
    %vm159 = vcmp.lt.s32.totalorder %v139, 2
    %vm160 = vcmp.lt.s32.totalorder %v139, 3
    %vm161 = vcmp.lt.s32.totalorder %v139, 4
    %v162 = vsel %vm158, %v142, %v145
    %v163 = vsel %vm161, %v151, 2102212464
    %v164 = vsel %vm160, %v148, %v163
    %v165 = vsel %vm159, %v162, %v164
    %v166 = vsel %vm158, %v145, %v148
    %v167 = vsel %vm161, %v154, 920167782
    %v168 = vsel %vm160, %v151, %v167
    %v169 = vsel %vm159, %v166, %v168
    %v170 = vsel %vm158, %v148, %v151
    %v171 = vsel %vm161, %v157, 1326507024
    %v172 = vsel %vm160, %v154, %v171
    %v173 = vsel %vm159, %v170, %v172
    %v174 = vshll.u32 %v134, 8
    %v175 = vmul.u32.u64.compose %v174, %v173
    %v176 = vextract.low.u32 %v175
    %v177 = vextract.high.u32 %v175
    %v178 = vmul.u32.u64.compose %v174, %v169
    %v179 = vextract.low.u32 %v178
    %v180 = vextract.high.u32 %v178
    %v181 = vmul.u32 %v174, %v165
    %v182 = vadd.s32 %v177, %v179
    %vm183 = vc.u32 %v177, %v179
    %v184 = vadd.s32 %v180, 1
    %v185 = vsel %vm183, %v184, %v180
    %v186 = vadd.s32 %v181, %v185
    %v187 = vadd.s32 %v186, 536870912
    %v188 = vshrl.u32 %v187, 30
    %v189 = vshll.u32 %v188, 30
    %v190 = vsub.s32 %v186, %v189
    %vm191 = vcmp.lt.s32.totalorder %v190, 0
    %v192 = vsub.s32 0, %v190
    %v193 = vsel %vm191, %v192, %v190
    %v194 = vclz %v193
    %v195 = vsub.s32 %v194, 2
    %vm196 = vcmp.gt.s32.totalorder 0, %v195
    %v197 = vsel %vm196, 0, %v195
    %v198 = vsub.s32 32, %v197
    %v199 = vshll.u32 %v190, %v197
    %v200 = vshrl.u32 %v182, %v198
    %v201 = vor.u32 %v199, %v200
    %v202 = vsub.s32 4294967266, %v197
    %v203 = vadd.s32 %v202, 127
    %v204 = vshll.u32 %v203, 23
    %v205 = vor.u32 4788187, %v204
    %v206 = vand.u32 2147483647, %v205
    %v208 = vcvt.s32.f32 %v201
    %v209 = vmul.f32 %v208, %v206
    %v210 = vxor.u32 %v209, 2147483648
    %v211 = vsel %vm128, %v210, %v209
    %v212 = vsub.s32 4, %v188
    %v213 = vsel %vm128, %v212, %v188
    %v214 = vsel %vm127, %v125, %v211
    %v215 = vsel %vm127, 0, %v213
    %v216 = vcosq.f32.pop %v214
    %v217 = vsinq.f32.pop %v214
    %vm218 = vweird.f32 %v125
    %v219 = vand.u32 %v215, 3
    %vm220 = vcmp.lt.s32.totalorder %v219, 2
    %vm221 = vcmp.eq.s32.totalorder %v219, 0
    %v222 = vxor.u32 %v217, 2147483648
    %v223 = vsel %vm221, %v216, %v222
    %vm224 = vcmp.eq.s32.totalorder %v219, 2
    %v225 = vxor.u32 %v216, 2147483648
    %v226 = vsel %vm224, %v225, %v217
    %v227 = vsel %vm220, %v223, %v226
    %v228 = vsel %vm218, nan, %v227
    %v229 = vmul.f32 %v122, %v228
    %230 = vst [vmem:[#allocation10] sm:$0xff] %v229
    %v231 = vand.u32 2147483647, %v125
    %vm232 = vcmp.le.f32.partialorder %v231, 0.7853982
    %vm233 = vcmp.lt.s32.totalorder %v125, 0
    %v234 = vand.u32 %v125, 2139095040
    %v235 = vshrl.u32 %v234, 23
    %v236 = vsub.s32 %v235, 127
    %v237 = vand.u32 2147483647, %v125
    %v238 = vand.u32 %v237, 8388607
    %v239 = vor.u32 %v238, 8388608
    %v240 = vsub.s32 0, %v239
    %v241 = vadd.s32 %v236, 1
    %vm242 = vcmp.gt.s32.totalorder %v241, 0
    %v243 = vsel %vm242, %v241, 0
    %v244 = vshrl.u32 %v243, 5
    %v245 = vand.u32 %v243, 31
    %v246 = vsub.s32 32, %v245
    %v247 = vshrl.u32 683565275, %v246
    %v248 = vshll.u32 683565275, %v245
    %v249 = vshrl.u32 2475754826, %v246
    %v250 = vor.u32 %v248, %v249
    %v251 = vshll.u32 2475754826, %v245
    %v252 = vshrl.u32 2131351028, %v246
    %v253 = vor.u32 %v251, %v252
    %v254 = vshll.u32 2131351028, %v245
    %v255 = vshrl.u32 2102212464, %v246
    %v256 = vor.u32 %v254, %v255
    %v257 = vshll.u32 2102212464, %v245
    %v258 = vshrl.u32 920167782, %v246
    %v259 = vor.u32 %v257, %v258
    %v260 = vshll.u32 920167782, %v245
    %v261 = vshrl.u32 1326507024, %v246
    %v262 = vor.u32 %v260, %v261
    %vm263 = vcmp.lt.s32.totalorder %v244, 1
    %vm264 = vcmp.lt.s32.totalorder %v244, 2
    %vm265 = vcmp.lt.s32.totalorder %v244, 3
    %vm266 = vcmp.lt.s32.totalorder %v244, 4
    %v267 = vsel %vm263, %v247, %v250
    %v268 = vsel %vm266, %v256, 2102212464
    %v269 = vsel %vm265, %v253, %v268
    %v270 = vsel %vm264, %v267, %v269
    %v271 = vsel %vm263, %v250, %v253
    %v272 = vsel %vm266, %v259, 920167782
    %v273 = vsel %vm265, %v256, %v272
    %v274 = vsel %vm264, %v271, %v273
    %v275 = vsel %vm263, %v253, %v256
    %v276 = vsel %vm266, %v262, 1326507024
    %v277 = vsel %vm265, %v259, %v276
    %v278 = vsel %vm264, %v275, %v277
    %v279 = vshll.u32 %v239, 8
    %v280 = vmul.u32.u64.compose %v279, %v278
    %v281 = vextract.low.u32 %v280
    %v282 = vextract.high.u32 %v280
    %v283 = vmul.u32.u64.compose %v279, %v274
    %v284 = vextract.low.u32 %v283
    %v285 = vextract.high.u32 %v283
    %v286 = vmul.u32 %v279, %v270
    %v287 = vadd.s32 %v282, %v284
    %vm288 = vc.u32 %v282, %v284
    %v289 = vadd.s32 %v285, 1
    %v290 = vsel %vm288, %v289, %v285
    %v291 = vadd.s32 %v286, %v290
    %v292 = vadd.s32 %v291, 536870912
    %v293 = vshrl.u32 %v292, 30
    %v294 = vshll.u32 %v293, 30
    %v295 = vsub.s32 %v291, %v294
    %vm296 = vcmp.lt.s32.totalorder %v295, 0
    %v297 = vsub.s32 0, %v295
    %v298 = vsel %vm296, %v297, %v295
    %v299 = vclz %v298
    %v300 = vsub.s32 %v299, 2
    %vm301 = vcmp.gt.s32.totalorder 0, %v300
    %v302 = vsel %vm301, 0, %v300
    %v303 = vsub.s32 32, %v302
    %v304 = vshll.u32 %v295, %v302
    %v305 = vshrl.u32 %v287, %v303
    %v306 = vor.u32 %v304, %v305
    %v307 = vsub.s32 4294967266, %v302
    %v308 = vadd.s32 %v307, 127
    %v309 = vshll.u32 %v308, 23
    %v310 = vor.u32 4788187, %v309
    %v311 = vand.u32 2147483647, %v310
    %v313 = vcvt.s32.f32 %v306
    %v314 = vmul.f32 %v313, %v311
    %v315 = vxor.u32 %v314, 2147483648
    %v316 = vsel %vm233, %v315, %v314
    %v317 = vsub.s32 4, %v293
    %v318 = vsel %vm233, %v317, %v293
    %v319 = vsel %vm232, %v125, %v316
    %v320 = vsel %vm232, 0, %v318
    %v321 = vcosq.f32.pop %v319
    %v322 = vsinq.f32.pop %v319
    %vm323 = vweird.f32 %v125
    %v324 = vadd.s32 %v320, 3
    %v325 = vand.u32 %v324, 3
    %vm326 = vcmp.lt.s32.totalorder %v325, 2
    %vm327 = vcmp.eq.s32.totalorder %v325, 0
    %v328 = vxor.u32 %v322, 2147483648
    %v329 = vsel %vm327, %v321, %v328
    %vm330 = vcmp.eq.s32.totalorder %v325, 2
    %v331 = vxor.u32 %v321, 2147483648
    %v332 = vsel %vm330, %v331, %v322
    %v333 = vsel %vm326, %v329, %v332
    %v334 = vsel %vm323, nan, %v333
    %v335 = vmul.f32 %v122, %v334
    %336 = vst [vmem:[#allocation11] sm:$0xff] %v335
    // Predicated region
    $region34: #{tpu_custom_call.1} parent=1 // pred_check
      _
    $region35: #{tpu_custom_call.1} parent=1 // pred_check_branch
      %338 = sbr.rel (0) target = $region37
    $region36: #{tpu_custom_call.1} parent=1 // pred_region
      %s340 = ssub.s32 128, 128
      %341 = vsyncadd [#allocation4], %s340
      %s343 = sshll.u32 [#allocation10], 4
      %s344 = int_to_ptr.vmem [resolvable:$true] %s343
      %346 = dma.vmem_to_hbm [thread:$0]  %s344, 128, %s4, [#allocation4]
    $region37: #{tpu_custom_call.1} parent=1 // pred_fallthru
      _
    // Predicated region
    $region38: #{tpu_custom_call.1} parent=1 // pred_check
      _
    $region39: #{tpu_custom_call.1} parent=1 // pred_check_branch
      %348 = sbr.rel (0) target = $region41
    $region40: #{tpu_custom_call.1} parent=1 // pred_region
      %s350 = ssub.s32 128, 128
      %351 = vsyncadd [#allocation12], %s350
      %s353 = sshll.u32 [#allocation11], 4
      %s354 = int_to_ptr.vmem [resolvable:$true] %s353
      %356 = dma.vmem_to_hbm [thread:$0]  %s354, 128, %s5, [#allocation12]
    $region41: #{tpu_custom_call.1} parent=1 // pred_fallthru
      _
    // Predicated region
    $region42: #{tpu_custom_call.1} parent=1 // pred_check
      _
    $region43: #{tpu_custom_call.1} parent=1 // pred_check_branch
      %358 = sbr.rel (0) target = $region45
    $region44: #{tpu_custom_call.1} parent=1 // pred_region
      %359 = dma.done [#allocation4], 128
    $region45: #{tpu_custom_call.1} parent=1 // pred_fallthru
      _
    // Predicated region
    $region46: #{tpu_custom_call.1} parent=1 // pred_check
      _
    $region47: #{tpu_custom_call.1} parent=1 // pred_check_branch
      %361 = sbr.rel (0) target = $region49
    $region48: #{tpu_custom_call.1} parent=1 // pred_region
      %362 = dma.done [#allocation12], 128
    $region49: #{tpu_custom_call.1} parent=1 // pred_fallthru
      _
    %363 = vsyncpa [#allocation3], 1
    %364 = vsyncpa [#allocation6], 1
    %365 = vsyncpa [#allocation9], 1
    %366 = vsyncpa [#allocation4], 1
    %367 = vsyncpa [#allocation12], 1

</llo_original>
